<compile_context>
chip_gen: v7x
topology: tpu7x:2x2x1
jax: 0.10.0
libtpu: 0.0.40
codegen_flags: <defaults>
</compile_context>

<pallas_src>
import functools

import jax
import jax.numpy as jnp
from jax import lax
from jax.experimental import pallas as pl
from jax.experimental.pallas import tpu as pltpu


def _dwconv_kernel(x_ref, w_ref, b_ref, o_ref):
    # x_ref: (1, H, W, TC)  un-padded input tile (one batch elem, one channel tile)
    # w_ref: (3, 3, TC)     depthwise weights (tap-major, channel-last)
    # b_ref: (1, TC)        bias
    # o_ref: (1, H, W, TC)  output tile
    H = o_ref.shape[1]
    W = o_ref.shape[2]
    C = o_ref.shape[3]

    x = x_ref[0].astype(jnp.float32)        # (H, W, C)
    wf = w_ref[...].astype(jnp.float32)     # (3, 3, C) -- loaded once
    bf = b_ref[0].astype(jnp.float32)       # (C,)

    # Hoisted column (W / sublane axis) shifts: build the 3 dx-shifted planes
    # once (2 shifted materializations instead of 6 unaligned sublane slices).
    zcol = jnp.zeros((H, 1, C), jnp.float32)
    plane_l = jnp.concatenate([zcol, x[:, :W - 1, :]], axis=1)   # tap reads col w-1
    plane_c = x                                                  # tap reads col w
    plane_r = jnp.concatenate([x[:, 1:, :], zcol], axis=1)       # tap reads col w+1

    # Pad each plane with one zero row top/bottom along H (major axis, cheap),
    # so every (dy, dx) tap is a static major-axis slice with no sublane moves.
    zrow = jnp.zeros((1, W, C), jnp.float32)
    padded = tuple(
        jnp.concatenate([zrow, p, zrow], axis=0)                 # (H+2, W, C)
        for p in (plane_l, plane_c, plane_r)
    )

    # 3x3 depthwise conv = 9 shifted multiply-accumulates; start from the bias.
    acc = jnp.broadcast_to(bf, (H, W, C))
    for dy in range(3):
        for dx in range(3):
            tap = padded[dx][dy:dy + H]                          # (H, W, C)
            acc = acc + tap * wf[dy, dx]
    o_ref[0] = acc.astype(o_ref.dtype)


def _vmem_estimate(H, W, tc, itemsize):
    blk = H * W * tc
    # in + out, double buffered, plus ~8x f32 in-kernel intermediates.
    return 4 * blk * itemsize + 8 * blk * 4


def _pick_channel_tiling(C, H, W, itemsize):
    """Returns (C_pad, TC): padded channel count and per-block channel tile."""
    budget = 32 * 1024 * 1024
    if C % 128 == 0:
        for tc in (512, 384, 256, 128):
            if C % tc == 0 and _vmem_estimate(H, W, tc, itemsize) <= budget:
                return C, tc
        return C, 128
    # Lane-unaligned C: single full-C block avoids an extra HBM pad/slice pass.
    if _vmem_estimate(H, W, C, itemsize) <= budget:
        return C, C
    # Fallback for huge, awkward C: pad channels to a multiple of 128 and tile.
    c_pad = ((C + 127) // 128) * 128
    return c_pad, 128


@functools.partial(jax.jit, static_argnames=("H", "W"))
def dwconv_forward(x, weight, bias, H, W):
    """x: (B, N, C) with N == H*W; weight: (3, 3, C); bias: (C,). Returns (B, N, C)."""
    B, N, C = x.shape
    assert N == H * W
    assert weight.shape == (3, 3, C)
    assert bias.shape == (C,)

    itemsize = x.dtype.itemsize
    C_pad, TC = _pick_channel_tiling(C, H, W, itemsize)

    # (B, N, C) -> (B, H, W, C); pad channels only if the fallback path chose to.
    x_nhwc = x.reshape(B, H, W, C)
    if C_pad != C:
        pad_c = C_pad - C
        x_nhwc = jnp.pad(x_nhwc, ((0, 0), (0, 0), (0, 0), (0, pad_c)))
        weight = jnp.pad(weight, ((0, 0), (0, 0), (0, pad_c)))
        bias = jnp.pad(bias, ((0, pad_c),))
    bias2d = bias.reshape(1, C_pad)

    n_ct = C_pad // TC

    cost = pl.CostEstimate(
        flops=18 * B * H * W * C_pad,
        transcendentals=0,
        bytes_accessed=(2 * B * H * W * C_pad * itemsize          # input + output
                        + (9 * C_pad + C_pad) * weight.dtype.itemsize),
    )

    est = _vmem_estimate(H, W, TC, itemsize)
    vmem_limit = None
    if est > 12 * 1024 * 1024:
        vmem_limit = min(2 * est, 64 * 1024 * 1024)

    out_nhwc = pl.pallas_call(
        _dwconv_kernel,
        out_shape=jax.ShapeDtypeStruct((B, H, W, C_pad), x.dtype),
        grid_spec=pltpu.PrefetchScalarGridSpec(
            num_scalar_prefetch=0,
            grid=(B, n_ct),
            in_specs=[
                pl.BlockSpec((1, H, W, TC), lambda b, c: (b, 0, 0, c)),
                pl.BlockSpec((3, 3, TC), lambda b, c: (0, 0, c)),
                pl.BlockSpec((1, TC), lambda b, c: (0, c)),
            ],
            out_specs=pl.BlockSpec((1, H, W, TC), lambda b, c: (b, 0, 0, c)),
        ),
        compiler_params=pltpu.CompilerParams(
            dimension_semantics=("parallel", "parallel"),
            vmem_limit_bytes=vmem_limit),
        cost_estimate=cost,
    )(x_nhwc, weight, bias2d)

    if C_pad != C:
        out_nhwc = out_nhwc[..., :C]
    return out_nhwc.reshape(B, N, C)


def _reference_dwconv(x, weight, bias, H, W):
    """Pure-JAX reference matching PyTorch nn.Conv2d(groups=dim) semantics."""
    B, N, C = x.shape
    x_nchw = jnp.transpose(x, (0, 2, 1)).reshape(B, C, H, W)
    w_oihw = jnp.transpose(weight, (2, 0, 1))[:, None, :, :]  # (C, 1, 3, 3)
    y = lax.conv_general_dilated(
        x_nchw, w_oihw,
        window_strides=(1, 1),
        padding=((1, 1), (1, 1)),
        dimension_numbers=("NCHW", "OIHW", "NCHW"),
        feature_group_count=C,
    )
    y = y + bias[None, :, None, None]
    return jnp.transpose(y.reshape(B, C, H * W), (0, 2, 1))


def _run_case(key, B, H, W, C):
    N = H * W
    kx, kw, kb = jax.random.split(key, 3)
    x = jax.random.normal(kx, (B, N, C), dtype=jnp.float32)
    weight = jax.random.normal(kw, (3, 3, C), dtype=jnp.float32) * 0.1
    bias = jax.random.normal(kb, (C,), dtype=jnp.float32) * 0.1

    out = dwconv_forward(x, weight, bias, H, W)
    out = jax.block_until_ready(out)

    ref = _reference_dwconv(x, weight, bias, H, W)
    assert out.shape == (B, N, C)
    assert jnp.allclose(out, ref, atol=1e-5, rtol=1e-5)


if __name__ == "__main__":
    # Small shapes consistent with DWConv forward: x is (B, N=H*W, C=dim).
    key = jax.random.PRNGKey(0)
    k1, k2 = jax.random.split(key)
    # C=32  -> lane-unaligned path (single full-C block, no HBM pad pass).
    _run_case(k1, B=2, H=8, W=8, C=32)
    # C=256 -> lane-aligned path (128-multiple channel tiling).
    _run_case(k2, B=2, H=8, W=8, C=256)

    print("KERNEL_OK")
</pallas_src>

<mosaic_0001>
module attributes {stable_mosaic.version = 11 : i64} {
  func.func @_dwconv_kernel(%arg0: i32, %arg1: i32, %arg2: memref<1x8x8x32xf32, #tpu.memory_space<vmem>>, %arg3: memref<3x3x32xf32, #tpu.memory_space<vmem>>, %arg4: memref<1x32xf32, #tpu.memory_space<vmem>>, %arg5: memref<1x8x8x32xf32, #tpu.memory_space<vmem>>) attributes {dimension_semantics = [#tpu.dimension_semantics<parallel>, #tpu.dimension_semantics<parallel>], iteration_bounds = array<i64: 2, 1>, scalar_prefetch = 0 : i64, scratch_operands = 0 : i64, tpu.core_type = #tpu.core_type<tc>, window_params = [{transform_indices = @transform_0, window_bounds = array<i64: 1, 8, 8, 32>}, {transform_indices = @transform_1, window_bounds = array<i64: 3, 3, 32>}, {transform_indices = @transform_2, window_bounds = array<i64: 1, 32>}, {transform_indices = @transform_3, window_bounds = array<i64: 1, 8, 8, 32>}]} {
    %c0 = arith.constant 0 : index
    %c0_0 = arith.constant 0 : index
    %c0_1 = arith.constant 0 : index
    %c0_2 = arith.constant 0 : index
    %0 = vector.load %arg2[%c0, %c0_0, %c0_1, %c0_2] : memref<1x8x8x32xf32, #tpu.memory_space<vmem>>, vector<1x8x8x32xf32>
    %1 = vector.shape_cast %0 : vector<1x8x8x32xf32> to vector<8x8x32xf32>
    %c0_3 = arith.constant 0 : index
    %c0_4 = arith.constant 0 : index
    %c0_5 = arith.constant 0 : index
    %2 = vector.load %arg3[%c0_3, %c0_4, %c0_5] : memref<3x3x32xf32, #tpu.memory_space<vmem>>, vector<3x3x32xf32>
    %c0_6 = arith.constant 0 : index
    %c0_7 = arith.constant 0 : index
    %3 = vector.load %arg4[%c0_6, %c0_7] : memref<1x32xf32, #tpu.memory_space<vmem>>, vector<1x32xf32>
    %4 = vector.shape_cast %3 : vector<1x32xf32> to vector<32xf32>
    %cst = arith.constant 0.000000e+00 : f32
    %5 = vector.broadcast %cst : f32 to vector<8x1x32xf32>
    %6 = vector.extract_strided_slice %1 {offsets = [0, 0, 0], sizes = [8, 7, 32], strides = [1, 1, 1]} : vector<8x8x32xf32> to vector<8x7x32xf32>
    %7 = tpu.concatenate %5, %6 in 1 : vector<8x1x32xf32>, vector<8x7x32xf32> -> vector<8x8x32xf32>
    %8 = vector.extract_strided_slice %1 {offsets = [0, 1, 0], sizes = [8, 7, 32], strides = [1, 1, 1]} : vector<8x8x32xf32> to vector<8x7x32xf32>
    %9 = tpu.concatenate %8, %5 in 1 : vector<8x7x32xf32>, vector<8x1x32xf32> -> vector<8x8x32xf32>
    %cst_8 = arith.constant 0.000000e+00 : f32
    %10 = vector.broadcast %cst_8 : f32 to vector<1x8x32xf32>
    %11 = tpu.concatenate %10, %7, %10 in 0 : vector<1x8x32xf32>, vector<8x8x32xf32>, vector<1x8x32xf32> -> vector<10x8x32xf32>
    %12 = tpu.concatenate %10, %1, %10 in 0 : vector<1x8x32xf32>, vector<8x8x32xf32>, vector<1x8x32xf32> -> vector<10x8x32xf32>
    %13 = tpu.concatenate %10, %9, %10 in 0 : vector<1x8x32xf32>, vector<8x8x32xf32>, vector<1x8x32xf32> -> vector<10x8x32xf32>
    %14 = vector.shape_cast %4 : vector<32xf32> to vector<1x1x32xf32>
    %15 = vector.broadcast %14 : vector<1x1x32xf32> to vector<8x8x32xf32>
    %16 = vector.extract_strided_slice %11 {offsets = [0, 0, 0], sizes = [8, 8, 32], strides = [1, 1, 1]} : vector<10x8x32xf32> to vector<8x8x32xf32>
    %17 = vector.extract_strided_slice %2 {offsets = [0, 0, 0], sizes = [1, 1, 32], strides = [1, 1, 1]} : vector<3x3x32xf32> to vector<1x1x32xf32>
    %18 = vector.shape_cast %17 : vector<1x1x32xf32> to vector<32xf32>
    %19 = vector.shape_cast %18 : vector<32xf32> to vector<1x1x32xf32>
    %20 = vector.broadcast %19 : vector<1x1x32xf32> to vector<8x8x32xf32>
    %21 = arith.mulf %16, %20 : vector<8x8x32xf32>
    %22 = arith.addf %15, %21 : vector<8x8x32xf32>
    %23 = vector.extract_strided_slice %12 {offsets = [0, 0, 0], sizes = [8, 8, 32], strides = [1, 1, 1]} : vector<10x8x32xf32> to vector<8x8x32xf32>
    %24 = vector.extract_strided_slice %2 {offsets = [0, 1, 0], sizes = [1, 1, 32], strides = [1, 1, 1]} : vector<3x3x32xf32> to vector<1x1x32xf32>
    %25 = vector.shape_cast %24 : vector<1x1x32xf32> to vector<32xf32>
    %26 = vector.shape_cast %25 : vector<32xf32> to vector<1x1x32xf32>
    %27 = vector.broadcast %26 : vector<1x1x32xf32> to vector<8x8x32xf32>
    %28 = arith.mulf %23, %27 : vector<8x8x32xf32>
    %29 = arith.addf %22, %28 : vector<8x8x32xf32>
    %30 = vector.extract_strided_slice %13 {offsets = [0, 0, 0], sizes = [8, 8, 32], strides = [1, 1, 1]} : vector<10x8x32xf32> to vector<8x8x32xf32>
    %31 = vector.extract_strided_slice %2 {offsets = [0, 2, 0], sizes = [1, 1, 32], strides = [1, 1, 1]} : vector<3x3x32xf32> to vector<1x1x32xf32>
    %32 = vector.shape_cast %31 : vector<1x1x32xf32> to vector<32xf32>
    %33 = vector.shape_cast %32 : vector<32xf32> to vector<1x1x32xf32>
    %34 = vector.broadcast %33 : vector<1x1x32xf32> to vector<8x8x32xf32>
    %35 = arith.mulf %30, %34 : vector<8x8x32xf32>
    %36 = arith.addf %29, %35 : vector<8x8x32xf32>
    %37 = vector.extract_strided_slice %11 {offsets = [1, 0, 0], sizes = [8, 8, 32], strides = [1, 1, 1]} : vector<10x8x32xf32> to vector<8x8x32xf32>
    %38 = vector.extract_strided_slice %2 {offsets = [1, 0, 0], sizes = [1, 1, 32], strides = [1, 1, 1]} : vector<3x3x32xf32> to vector<1x1x32xf32>
    %39 = vector.shape_cast %38 : vector<1x1x32xf32> to vector<32xf32>
    %40 = vector.shape_cast %39 : vector<32xf32> to vector<1x1x32xf32>
    %41 = vector.broadcast %40 : vector<1x1x32xf32> to vector<8x8x32xf32>
    %42 = arith.mulf %37, %41 : vector<8x8x32xf32>
    %43 = arith.addf %36, %42 : vector<8x8x32xf32>
    %44 = vector.extract_strided_slice %12 {offsets = [1, 0, 0], sizes = [8, 8, 32], strides = [1, 1, 1]} : vector<10x8x32xf32> to vector<8x8x32xf32>
    %45 = vector.extract_strided_slice %2 {offsets = [1, 1, 0], sizes = [1, 1, 32], strides = [1, 1, 1]} : vector<3x3x32xf32> to vector<1x1x32xf32>
    %46 = vector.shape_cast %45 : vector<1x1x32xf32> to vector<32xf32>
    %47 = vector.shape_cast %46 : vector<32xf32> to vector<1x1x32xf32>
    %48 = vector.broadcast %47 : vector<1x1x32xf32> to vector<8x8x32xf32>
    %49 = arith.mulf %44, %48 : vector<8x8x32xf32>
    %50 = arith.addf %43, %49 : vector<8x8x32xf32>
    %51 = vector.extract_strided_slice %13 {offsets = [1, 0, 0], sizes = [8, 8, 32], strides = [1, 1, 1]} : vector<10x8x32xf32> to vector<8x8x32xf32>
    %52 = vector.extract_strided_slice %2 {offsets = [1, 2, 0], sizes = [1, 1, 32], strides = [1, 1, 1]} : vector<3x3x32xf32> to vector<1x1x32xf32>
    %53 = vector.shape_cast %52 : vector<1x1x32xf32> to vector<32xf32>
    %54 = vector.shape_cast %53 : vector<32xf32> to vector<1x1x32xf32>
    %55 = vector.broadcast %54 : vector<1x1x32xf32> to vector<8x8x32xf32>
    %56 = arith.mulf %51, %55 : vector<8x8x32xf32>
    %57 = arith.addf %50, %56 : vector<8x8x32xf32>
    %58 = vector.extract_strided_slice %11 {offsets = [2, 0, 0], sizes = [8, 8, 32], strides = [1, 1, 1]} : vector<10x8x32xf32> to vector<8x8x32xf32>
    %59 = vector.extract_strided_slice %2 {offsets = [2, 0, 0], sizes = [1, 1, 32], strides = [1, 1, 1]} : vector<3x3x32xf32> to vector<1x1x32xf32>
    %60 = vector.shape_cast %59 : vector<1x1x32xf32> to vector<32xf32>
    %61 = vector.shape_cast %60 : vector<32xf32> to vector<1x1x32xf32>
    %62 = vector.broadcast %61 : vector<1x1x32xf32> to vector<8x8x32xf32>
    %63 = arith.mulf %58, %62 : vector<8x8x32xf32>
    %64 = arith.addf %57, %63 : vector<8x8x32xf32>
    %65 = vector.extract_strided_slice %12 {offsets = [2, 0, 0], sizes = [8, 8, 32], strides = [1, 1, 1]} : vector<10x8x32xf32> to vector<8x8x32xf32>
    %66 = vector.extract_strided_slice %2 {offsets = [2, 1, 0], sizes = [1, 1, 32], strides = [1, 1, 1]} : vector<3x3x32xf32> to vector<1x1x32xf32>
    %67 = vector.shape_cast %66 : vector<1x1x32xf32> to vector<32xf32>
    %68 = vector.shape_cast %67 : vector<32xf32> to vector<1x1x32xf32>
    %69 = vector.broadcast %68 : vector<1x1x32xf32> to vector<8x8x32xf32>
    %70 = arith.mulf %65, %69 : vector<8x8x32xf32>
    %71 = arith.addf %64, %70 : vector<8x8x32xf32>
    %72 = vector.extract_strided_slice %13 {offsets = [2, 0, 0], sizes = [8, 8, 32], strides = [1, 1, 1]} : vector<10x8x32xf32> to vector<8x8x32xf32>
    %73 = vector.extract_strided_slice %2 {offsets = [2, 2, 0], sizes = [1, 1, 32], strides = [1, 1, 1]} : vector<3x3x32xf32> to vector<1x1x32xf32>
    %74 = vector.shape_cast %73 : vector<1x1x32xf32> to vector<32xf32>
    %75 = vector.shape_cast %74 : vector<32xf32> to vector<1x1x32xf32>
    %76 = vector.broadcast %75 : vector<1x1x32xf32> to vector<8x8x32xf32>
    %77 = arith.mulf %72, %76 : vector<8x8x32xf32>
    %78 = arith.addf %71, %77 : vector<8x8x32xf32>
    %c0_9 = arith.constant 0 : index
    %c0_10 = arith.constant 0 : index
    %c0_11 = arith.constant 0 : index
    %c0_12 = arith.constant 0 : index
    %79 = vector.load %arg5[%c0_9, %c0_10, %c0_11, %c0_12] : memref<1x8x8x32xf32, #tpu.memory_space<vmem>>, vector<1x8x8x32xf32>
    %80 = vector.shape_cast %79 : vector<1x8x8x32xf32> to vector<8x8x32xf32>
    %81 = vector.shape_cast %78 : vector<8x8x32xf32> to vector<1x8x8x32xf32>
    tpu.vector_store %arg5[%c0_9, %c0_10, %c0_11, %c0_12], %81 {strides = array<i32>} : memref<1x8x8x32xf32, #tpu.memory_space<vmem>>, vector<1x8x8x32xf32>,
    return
  }
  func.func @transform_0(%arg0: i32, %arg1: i32) -> (i32, i32, i32, i32) {
    %c0_i32 = arith.constant 0 : i32
    %c0_i32_0 = arith.constant 0 : i32
    %c0_i32_1 = arith.constant 0 : i32
    return %arg0, %c0_i32, %c0_i32_0, %arg1 : i32, i32, i32, i32
  }
  func.func @transform_1(%arg0: i32, %arg1: i32) -> (i32, i32, i32) {
    %c0_i32 = arith.constant 0 : i32
    %c0_i32_0 = arith.constant 0 : i32
    %c0_i32_1 = arith.constant 0 : i32
    return %c0_i32, %c0_i32_0, %arg1 : i32, i32, i32
  }
  func.func @transform_2(%arg0: i32, %arg1: i32) -> (i32, i32) {
    %c0_i32 = arith.constant 0 : i32
    %c0_i32_0 = arith.constant 0 : i32
    return %c0_i32, %arg1 : i32, i32
  }
  func.func @transform_3(%arg0: i32, %arg1: i32) -> (i32, i32, i32, i32) {
    %c0_i32 = arith.constant 0 : i32
    %c0_i32_0 = arith.constant 0 : i32
    %c0_i32_1 = arith.constant 0 : i32
    return %arg0, %c0_i32, %c0_i32_0, %arg1 : i32, i32, i32, i32
  }
}

</mosaic_0001>

<llo_original>
// kernel: dwconv_forward.1
$region0: #{dwconv_forward.1}
  #allocation0 [shape = 'u32[]', space=smem, size = 0x4, offset = 0x4, fixed_abs, tag = 'smem constant byte address 0x4 - core index']
  #allocation1 [shape = 'u32[144,128]{1,0:T(1,128)}', space=vmem, size = 0x12000, scoped, tag = 'internal scratch']
  %s0 = inlined_call_operand.vmem [shape: f32[2,8,8,32], index: 0, kind: input, shape index: {}]
  %s1 = inlined_call_operand.vmem [shape: f32[3,3,32], index: 1, kind: input, shape index: {}]
  %s2 = inlined_call_operand.vmem [shape: f32[1,32], index: 2, kind: input, shape index: {}]
  %s3 = inlined_call_operand.vmem [shape: f32[2,8,8,32], index: 3, kind: output, shape index: {}]
  %s4 = sld [smem:[#allocation0]]
  $region45: #{dwconv_forward.1} parent=0
    _
  %s6 = ssub.s32 1, %s4
  %s7 = scalar_select 0, %s6, %s4
  loop: start=0, step=1, limit=4
  $region2: #{dwconv_forward.1} parent=0 // loop_pre_header
    _
  $region3: #{dwconv_forward.1} parent=0 // loop_header
    %s9 = sphi 0, %s13
    %p10 = scmp.ge.s32.totalorder %s9, 4
    %s16 = sphi 0, %s28
    %s17 = sphi 0, %s24
    %s18 = sphi 0, %s16
    %s19 = sphi 0, %s17
    %s20 = sphi 0, %s18
    %s21 = sphi 0, %s19
    %s33 = sphi 0, %s35
    %s36 = sphi 0, %s33
    %s37 = sphi 0, %s36
    %s53 = sphi 0, %s37
    %s59 = sphi 0, %s61
    %s62 = sphi 0, %s59
    %s63 = sphi 0, %s62
    %s79 = sphi 0, %s63
    %s85 = sphi 0, %s87
    %s88 = sphi 0, %s85
    %s89 = sphi 0, %s88
    %s105 = sphi 0, %s89
    %s113 = sphi 0, %s115
    %s116 = sphi 0, %s113
    %s117 = sphi 0, %s116
    %s133 = sphi 0, %s117
  $region4: #{dwconv_forward.1} parent=0 // loop_header_branch
    %12 = sbr.rel (%p10) target = $region8
  $region5: #{dwconv_forward.1} parent=0 // loop_body
    %s14 = ssub.s32 %s9, 1
    %s15 = ssub.s32 %s9, 2
    %s22 = sadd.s32 1, %s17
    %p23 = scmp.ge.s32.totalorder %s22, 1
    %s24 = scalar_select %p23, 0, %s22
    %s25 = sadd.s32 1, %s16
    %s26 = scalar_select %p23, %s25, %s16
    %p27 = scmp.ge.s32.totalorder %s26, 2
    %s28 = scalar_select %p27, 0, %s26
    %s29 = ssub.s32 %s16, %s28
    %s30 = ssub.s32 %s17, %s24
    %s31 = sor.u32 %s29, %s30
    %p32 = scmp.eq.s32.totalorder %s31, 0
    %s34 = sadd.s32 %s33, 1
    %s35 = scalar_select %p32, %s33, %s34
    %p38 = pneg %p32
    %p39 = scmp.eq.s32.totalorder %s9, 1
    %p40 = por %p38, %p39
    %p41 = scmp.ne.s32.totalorder %s33, %s36
    %p42 = scmp.eq.s32.totalorder %s9, 0
    %p43 = por %p41, %p42
    %p44 = scmp.ne.s32.totalorder %s33, %s36
    %p45 = scmp.eq.s32.totalorder %s14, 1
    %p46 = por %p44, %p45
    %p47 = scmp.ne.s32.totalorder %s36, %s37
    %p48 = scmp.eq.s32.totalorder %s14, 0
    %p49 = por %p47, %p48
    %p50 = scmp.ne.s32.totalorder %s36, %s37
    %p51 = scmp.eq.s32.totalorder %s15, 1
    %p52 = por %p50, %p51
    %p54 = scmp.ne.s32.totalorder %s37, %s53
    %p55 = scmp.eq.s32.totalorder %s15, 0
    %p56 = por %p54, %p55
    %s57 = ssub.s32 %s17, %s24
    %p58 = scmp.eq.s32.totalorder %s57, 0
    %s60 = sadd.s32 %s59, 1
    %s61 = scalar_select %p58, %s59, %s60
    %p64 = pneg %p58
    %p65 = scmp.eq.s32.totalorder %s9, 1
    %p66 = por %p64, %p65
    %p67 = scmp.ne.s32.totalorder %s59, %s62
    %p68 = scmp.eq.s32.totalorder %s9, 0
    %p69 = por %p67, %p68
    %p70 = scmp.ne.s32.totalorder %s59, %s62
    %p71 = scmp.eq.s32.totalorder %s14, 1
    %p72 = por %p70, %p71
    %p73 = scmp.ne.s32.totalorder %s62, %s63
    %p74 = scmp.eq.s32.totalorder %s14, 0
    %p75 = por %p73, %p74
    %p76 = scmp.ne.s32.totalorder %s62, %s63
    %p77 = scmp.eq.s32.totalorder %s15, 1
    %p78 = por %p76, %p77
    %p80 = scmp.ne.s32.totalorder %s63, %s79
    %p81 = scmp.eq.s32.totalorder %s15, 0
    %p82 = por %p80, %p81
    %s83 = ssub.s32 %s17, %s24
    %p84 = scmp.eq.s32.totalorder %s83, 0
    %s86 = sadd.s32 %s85, 1
    %s87 = scalar_select %p84, %s85, %s86
    %p90 = pneg %p84
    %p91 = scmp.eq.s32.totalorder %s9, 1
    %p92 = por %p90, %p91
    %p93 = scmp.ne.s32.totalorder %s85, %s88
    %p94 = scmp.eq.s32.totalorder %s9, 0
    %p95 = por %p93, %p94
    %p96 = scmp.ne.s32.totalorder %s85, %s88
    %p97 = scmp.eq.s32.totalorder %s14, 1
    %p98 = por %p96, %p97
    %p99 = scmp.ne.s32.totalorder %s88, %s89
    %p100 = scmp.eq.s32.totalorder %s14, 0
    %p101 = por %p99, %p100
    %p102 = scmp.ne.s32.totalorder %s88, %s89
    %p103 = scmp.eq.s32.totalorder %s15, 1
    %p104 = por %p102, %p103
    %p106 = scmp.ne.s32.totalorder %s89, %s105
    %p107 = scmp.eq.s32.totalorder %s15, 0
    %p108 = por %p106, %p107
    %s109 = ssub.s32 %s16, %s28
    %s110 = ssub.s32 %s17, %s24
    %s111 = sor.u32 %s109, %s110
    %p112 = scmp.eq.s32.totalorder %s111, 0
    %s114 = sadd.s32 %s113, 1
    %s115 = scalar_select %p112, %s113, %s114
    %p118 = pneg %p112
    %p119 = scmp.eq.s32.totalorder %s9, 1
    %p120 = por %p118, %p119
    %p121 = scmp.ne.s32.totalorder %s113, %s116
    %p122 = scmp.eq.s32.totalorder %s9, 0
    %p123 = por %p121, %p122
    %p124 = scmp.ne.s32.totalorder %s113, %s116
    %p125 = scmp.eq.s32.totalorder %s14, 1
    %p126 = por %p124, %p125
    %p127 = scmp.ne.s32.totalorder %s116, %s117
    %p128 = scmp.eq.s32.totalorder %s14, 0
    %p129 = por %p127, %p128
    %p130 = scmp.ne.s32.totalorder %s116, %s117
    %p131 = scmp.eq.s32.totalorder %s15, 1
    %p132 = por %p130, %p131
    %p134 = scmp.ne.s32.totalorder %s117, %s133
    %p135 = scmp.eq.s32.totalorder %s15, 0
    %p136 = por %p134, %p135
    %p137 = scmp.le.s32.totalorder 1, %s9
    %p138 = scmp.lt.s32.totalorder %s9, 3
    %p139 = pnand %p137, %p138
    %p140 = pneg %p139
    // Predicated region
    $region9: #{dwconv_forward.1} parent=5 // pred_check
      _
    $region10: #{dwconv_forward.1} parent=5 // pred_check_branch
      %142 = sbr.rel (%p139) target = $region12
    $region11: #{dwconv_forward.1} parent=5 // pred_region
      %s143 = ssub.s32 %s9, 1
      // Predicated region
      $region13: #{dwconv_forward.1} parent=11 // pred_check
        %p144 = pneg %p75
      $region14: #{dwconv_forward.1} parent=11 // pred_check_branch
        %146 = sbr.rel (%p144) target = $region16
      $region15: #{dwconv_forward.1} parent=11 // pred_region
        %p147 = scmp.lt.s32.totalorder %s19, 0
        %s148 = scalar_select %p147, %s19, 0
        %s149 = smul.addr %s148, 4
        %s150 = scalar_lea.vmem %s1, %s149
      $region16: #{dwconv_forward.1} parent=11 // pred_fallthru
        _
      // Predicated region
      $region17: #{dwconv_forward.1} parent=11 // pred_check
        %p151 = pneg %p101
      $region18: #{dwconv_forward.1} parent=11 // pred_check_branch
        %153 = sbr.rel (%p151) target = $region20
      $region19: #{dwconv_forward.1} parent=11 // pred_region
        %p154 = scmp.lt.s32.totalorder %s19, 0
        %s155 = scalar_select %p154, %s19, 0
        %s156 = scalar_lea.vmem %s2, %s155
      $region20: #{dwconv_forward.1} parent=11 // pred_fallthru
        _
    $region12: #{dwconv_forward.1} parent=5 // pred_fallthru
      _
    %p157 = scmp.lt.s32.totalorder %s9, 2
    // Predicated region
    $region21: #{dwconv_forward.1} parent=5 // pred_check
      %p158 = pneg %p157
    $region22: #{dwconv_forward.1} parent=5 // pred_check_branch
      %160 = sbr.rel (%p158) target = $region24
    $region23: #{dwconv_forward.1} parent=5 // pred_region
      // Predicated region
      $region25: #{dwconv_forward.1} parent=23 // pred_check
        %p161 = pneg %p43
      $region26: #{dwconv_forward.1} parent=23 // pred_check_branch
        %163 = sbr.rel (%p161) target = $region28
      $region27: #{dwconv_forward.1} parent=23 // pred_region
        %p164 = scmp.lt.s32.totalorder %s16, 1
        %s165 = scalar_select %p164, %s16, 1
        %p166 = scmp.lt.s32.totalorder %s17, 0
        %s167 = scalar_select %p166, %s17, 0
        %s168 = smul.addr %s165, 8
        %s169 = sadd.s32 %s167, %s168
        %s170 = smul.addr %s169, 8
        %s171 = scalar_lea.vmem %s0, %s170
      $region28: #{dwconv_forward.1} parent=23 // pred_fallthru
        _
    $region24: #{dwconv_forward.1} parent=5 // pred_fallthru
      _
    %p172 = scmp.le.s32.totalorder 1, %s9
    %p173 = scmp.lt.s32.totalorder %s9, 3
    %p174 = pnand %p172, %p173
    %p175 = pneg %p174
    // Predicated region
    $region29: #{dwconv_forward.1} parent=5 // pred_check
      _
    $region30: #{dwconv_forward.1} parent=5 // pred_check_branch
      %177 = sbr.rel (%p174) target = $region32
    $region31: #{dwconv_forward.1} parent=5 // pred_region
      %s178 = ssub.s32 %s9, 1
      %p179 = scmp.lt.s32.totalorder %s18, 1
      %s180 = scalar_select %p179, %s18, 1
      %p181 = scmp.lt.s32.totalorder %s19, 0
      %s182 = scalar_select %p181, %s19, 0
      %s183 = smul.addr %s180, 8
      %s184 = sadd.s32 %s182, %s183
      %s185 = smul.addr %s184, 8
      %s186 = scalar_lea.vmem %s0, %s185
      %p187 = pneg %p49
      %p188 = pneg %p46
      %p189 = scmp.lt.s32.totalorder %s19, 0
      %s190 = scalar_select %p189, %s19, 0
      %s191 = smul.addr %s190, 4
      %s192 = scalar_lea.vmem %s1, %s191
      %p193 = pneg %p75
      %p194 = pneg %p72
      %p195 = scmp.lt.s32.totalorder %s19, 0
      %s196 = scalar_select %p195, %s19, 0
      %s197 = scalar_lea.vmem %s2, %s196
      %p198 = pneg %p101
      %p199 = pneg %p98
      %p200 = pneg %p129
      %p201 = pneg %p126
      %p202 = scmp.lt.s32.totalorder %s18, 1
      %s203 = scalar_select %p202, %s18, 1
      %p204 = scmp.lt.s32.totalorder %s19, 0
      %s205 = scalar_select %p204, %s19, 0
      %s206 = smul.addr %s203, 8
      %s207 = sadd.s32 %s205, %s206
      %s208 = smul.addr %s207, 8
      %s209 = scalar_lea.vmem %s3, %s208
      %p210 = scmp.lt.s32.totalorder %s18, 1
      %s211 = scalar_select %p210, %s18, 1
      %p212 = scmp.lt.s32.totalorder %s19, 0
      %s213 = scalar_select %p212, %s19, 0
      %s214 = smul.addr %s211, 8
      %s215 = sadd.s32 %s213, %s214
      %s216 = smul.addr %s215, 8
      %s217 = scalar_lea.vmem %s0, %s216
      %p218 = scmp.lt.s32.totalorder %s19, 0
      %s219 = scalar_select %p218, %s19, 0
      %s220 = smul.addr %s219, 4
      %s221 = scalar_lea.vmem %s1, %s220
      %p222 = scmp.lt.s32.totalorder %s19, 0
      %s223 = scalar_select %p222, %s19, 0
      %s224 = scalar_lea.vmem %s2, %s223
      %p225 = scmp.lt.s32.totalorder %s18, 1
      %s226 = scalar_select %p225, %s18, 1
      %p227 = scmp.lt.s32.totalorder %s19, 0
      %s228 = scalar_select %p227, %s19, 0
      %s229 = smul.addr %s226, 8
      %s230 = sadd.s32 %s228, %s229
      %s231 = smul.addr %s230, 8
      %s232 = scalar_lea.vmem %s3, %s231
      %v233 = vld [vmem:[%s217] sm:$0xff]
      %v234 = vld [vmem:[%s217 + $0x8] sm:$0xff]
      %v235 = vld [vmem:[%s217 + $0x10] sm:$0xff]
      %v236 = vld [vmem:[%s217 + $0x18] sm:$0xff]
      %v237 = vld [vmem:[%s217 + $0x20] sm:$0xff]
      %v238 = vld [vmem:[%s217 + $0x28] sm:$0xff]
      %v239 = vld [vmem:[%s217 + $0x30] sm:$0xff]
      %v240 = vld [vmem:[%s217 + $0x38] sm:$0xff]
      %v241 = vld [vmem:[%s221] sm:$0x7]
      %v242 = vld [vmem:[%s221 + $0x4] sm:$0x7]
      %v243 = vld [vmem:[%s221 + $0x8] sm:$0x7]
      %v244 = vld [vmem:[%s224] sm:$0x1]
      %v253 = vrot.slane %v233, 7
      %v254 = vrot.slane %v234, 7
      %v255 = vrot.slane %v235, 7
      %v256 = vrot.slane %v236, 7
      %v257 = vrot.slane %v237, 7
      %v258 = vrot.slane %v238, 7
      %v259 = vrot.slane %v239, 7
      %v260 = vrot.slane %v240, 7
      %vm269 = vcmask 1040384
      %v270 = vsel %vm269, 0.0, %v253
      %v271 = vsel %vm269, 0.0, %v254
      %v272 = vsel %vm269, 0.0, %v255
      %v273 = vsel %vm269, 0.0, %v256
      %v274 = vsel %vm269, 0.0, %v257
      %v275 = vsel %vm269, 0.0, %v258
      %v276 = vsel %vm269, 0.0, %v259
      %v277 = vsel %vm269, 0.0, %v260
      %v278 = vrot.slane %v233, 1
      %v279 = vrot.slane %v234, 1
      %v280 = vrot.slane %v235, 1
      %v281 = vrot.slane %v236, 1
      %v282 = vrot.slane %v237, 1
      %v283 = vrot.slane %v238, 1
      %v284 = vrot.slane %v239, 1
      %v285 = vrot.slane %v240, 1
      %vm294 = vcmask 1046528
      %v295 = vsel %vm294, %v278, 0.0
      %v296 = vsel %vm294, %v279, 0.0
      %v297 = vsel %vm294, %v280, 0.0
      %v298 = vsel %vm294, %v281, 0.0
      %v299 = vsel %vm294, %v282, 0.0
      %v300 = vsel %vm294, %v283, 0.0
      %v301 = vsel %vm294, %v284, 0.0
      %v302 = vsel %vm294, %v285, 0.0
      %v304 = vlaneseq
      %v305 = vshrl.u32 %v304, 7
      %v306 = vsub.s32 0, %v305
      %v307 = vrot.slane %v244, %v306
      %v309 = vlaneseq
      %v310 = vshrl.u32 %v309, 7
      %v311 = vsub.s32 0, %v310
      %v312 = vrot.slane %v241, %v311
      %v313 = vmul.f32 %v312, 0.0
      %v314 = vmul.f32 %v270, %v312
      %v315 = vmul.f32 %v271, %v312
      %v316 = vmul.f32 %v272, %v312
      %v317 = vmul.f32 %v273, %v312
      %v318 = vmul.f32 %v274, %v312
      %v319 = vmul.f32 %v275, %v312
      %v320 = vmul.f32 %v276, %v312
      %v321 = vadd.f32 %v307, %v313
      %v322 = vadd.f32 %v307, %v314
      %v323 = vadd.f32 %v307, %v315
      %v324 = vadd.f32 %v307, %v316
      %v325 = vadd.f32 %v307, %v317
      %v326 = vadd.f32 %v307, %v318
      %v327 = vadd.f32 %v307, %v319
      %v328 = vadd.f32 %v307, %v320
      %v329 = vlaneseq
      %v330 = vshrl.u32 %v329, 7
      %v331 = vsub.s32 1, %v330
      %v332 = vrot.slane %v241, %v331
      %v333 = vmul.f32 %v332, 0.0
      %v334 = vmul.f32 %v233, %v332
      %v335 = vmul.f32 %v234, %v332
      %v336 = vmul.f32 %v235, %v332
      %v337 = vmul.f32 %v236, %v332
      %v338 = vmul.f32 %v237, %v332
      %v339 = vmul.f32 %v238, %v332
      %v340 = vmul.f32 %v239, %v332
      %v341 = vadd.f32 %v321, %v333
      %v342 = vadd.f32 %v322, %v334
      %v343 = vadd.f32 %v323, %v335
      %v344 = vadd.f32 %v324, %v336
      %v345 = vadd.f32 %v325, %v337
      %v346 = vadd.f32 %v326, %v338
      %v347 = vadd.f32 %v327, %v339
      %v348 = vadd.f32 %v328, %v340
      %v349 = vlaneseq
      %v350 = vshrl.u32 %v349, 7
      %v351 = vsub.s32 2, %v350
      %v352 = vrot.slane %v241, %v351
      %v353 = vmul.f32 %v352, 0.0
      %v354 = vmul.f32 %v295, %v352
      %v355 = vmul.f32 %v296, %v352
      %v356 = vmul.f32 %v297, %v352
      %v357 = vmul.f32 %v298, %v352
      %v358 = vmul.f32 %v299, %v352
      %v359 = vmul.f32 %v300, %v352
      %v360 = vmul.f32 %v301, %v352
      %v361 = vadd.f32 %v341, %v353
      %v362 = vadd.f32 %v342, %v354
      %v363 = vadd.f32 %v343, %v355
      %v364 = vadd.f32 %v344, %v356
      %v365 = vadd.f32 %v345, %v357
      %v366 = vadd.f32 %v346, %v358
      %v367 = vadd.f32 %v347, %v359
      %v368 = vadd.f32 %v348, %v360
      %v369 = vlaneseq
      %v370 = vshrl.u32 %v369, 7
      %v371 = vsub.s32 0, %v370
      %v372 = vrot.slane %v242, %v371
      %v373 = vmul.f32 %v270, %v372
      %v374 = vmul.f32 %v271, %v372
      %v375 = vmul.f32 %v272, %v372
      %v376 = vmul.f32 %v273, %v372
      %v377 = vmul.f32 %v274, %v372
      %v378 = vmul.f32 %v275, %v372
      %v379 = vmul.f32 %v276, %v372
      %v380 = vmul.f32 %v277, %v372
      %v381 = vadd.f32 %v361, %v373
      %v382 = vadd.f32 %v362, %v374
      %v383 = vadd.f32 %v363, %v375
      %v384 = vadd.f32 %v364, %v376
      %v385 = vadd.f32 %v365, %v377
      %v386 = vadd.f32 %v366, %v378
      %v387 = vadd.f32 %v367, %v379
      %v388 = vadd.f32 %v368, %v380
      %v389 = vlaneseq
      %v390 = vshrl.u32 %v389, 7
      %v391 = vsub.s32 1, %v390
      %v392 = vrot.slane %v242, %v391
      %v393 = vmul.f32 %v233, %v392
      %v394 = vmul.f32 %v234, %v392
      %v395 = vmul.f32 %v235, %v392
      %v396 = vmul.f32 %v236, %v392
      %v397 = vmul.f32 %v237, %v392
      %v398 = vmul.f32 %v238, %v392
      %v399 = vmul.f32 %v239, %v392
      %v400 = vmul.f32 %v240, %v392
      %v401 = vadd.f32 %v381, %v393
      %v402 = vadd.f32 %v382, %v394
      %v403 = vadd.f32 %v383, %v395
      %v404 = vadd.f32 %v384, %v396
      %v405 = vadd.f32 %v385, %v397
      %v406 = vadd.f32 %v386, %v398
      %v407 = vadd.f32 %v387, %v399
      %v408 = vadd.f32 %v388, %v400
      %v409 = vlaneseq
      %v410 = vshrl.u32 %v409, 7
      %v411 = vsub.s32 2, %v410
      %v412 = vrot.slane %v242, %v411
      %v413 = vmul.f32 %v295, %v412
      %v414 = vmul.f32 %v296, %v412
      %v415 = vmul.f32 %v297, %v412
      %v416 = vmul.f32 %v298, %v412
      %v417 = vmul.f32 %v299, %v412
      %v418 = vmul.f32 %v300, %v412
      %v419 = vmul.f32 %v301, %v412
      %v420 = vmul.f32 %v302, %v412
      %v421 = vadd.f32 %v401, %v413
      %v422 = vadd.f32 %v402, %v414
      %v423 = vadd.f32 %v403, %v415
      %v424 = vadd.f32 %v404, %v416
      %v425 = vadd.f32 %v405, %v417
      %v426 = vadd.f32 %v406, %v418
      %v427 = vadd.f32 %v407, %v419
      %v428 = vadd.f32 %v408, %v420
      %v429 = vlaneseq
      %v430 = vshrl.u32 %v429, 7
      %v431 = vsub.s32 0, %v430
      %v432 = vrot.slane %v243, %v431
      %v433 = vmul.f32 %v271, %v432
      %v434 = vmul.f32 %v272, %v432
      %v435 = vmul.f32 %v273, %v432
      %v436 = vmul.f32 %v274, %v432
      %v437 = vmul.f32 %v275, %v432
      %v438 = vmul.f32 %v276, %v432
      %v439 = vmul.f32 %v277, %v432
      %v440 = vmul.f32 %v432, 0.0
      %v441 = vadd.f32 %v421, %v433
      %v442 = vadd.f32 %v422, %v434
      %v443 = vadd.f32 %v423, %v435
      %v444 = vadd.f32 %v424, %v436
      %v445 = vadd.f32 %v425, %v437
      %v446 = vadd.f32 %v426, %v438
      %v447 = vadd.f32 %v427, %v439
      %v448 = vadd.f32 %v428, %v440
      %v449 = vlaneseq
      %v450 = vshrl.u32 %v449, 7
      %v451 = vsub.s32 1, %v450
      %v452 = vrot.slane %v243, %v451
      %v453 = vmul.f32 %v234, %v452
      %v454 = vmul.f32 %v235, %v452
      %v455 = vmul.f32 %v236, %v452
      %v456 = vmul.f32 %v237, %v452
      %v457 = vmul.f32 %v238, %v452
      %v458 = vmul.f32 %v239, %v452
      %v459 = vmul.f32 %v240, %v452
      %v460 = vmul.f32 %v452, 0.0
      %v461 = vadd.f32 %v441, %v453
      %v462 = vadd.f32 %v442, %v454
      %v463 = vadd.f32 %v443, %v455
      %v464 = vadd.f32 %v444, %v456
      %v465 = vadd.f32 %v445, %v457
      %v466 = vadd.f32 %v446, %v458
      %v467 = vadd.f32 %v447, %v459
      %v468 = vadd.f32 %v448, %v460
      %v469 = vlaneseq
      %v470 = vshrl.u32 %v469, 7
      %v471 = vsub.s32 2, %v470
      %v472 = vrot.slane %v243, %v471
      %v473 = vmul.f32 %v296, %v472
      %v474 = vmul.f32 %v297, %v472
      %v475 = vmul.f32 %v298, %v472
      %v476 = vmul.f32 %v299, %v472
      %v477 = vmul.f32 %v300, %v472
      %v478 = vmul.f32 %v301, %v472
      %v479 = vmul.f32 %v302, %v472
      %v480 = vmul.f32 %v472, 0.0
      %v481 = vadd.f32 %v461, %v473
      %v482 = vadd.f32 %v462, %v474
      %v483 = vadd.f32 %v463, %v475
      %v484 = vadd.f32 %v464, %v476
      %v485 = vadd.f32 %v465, %v477
      %v486 = vadd.f32 %v466, %v478
      %v487 = vadd.f32 %v467, %v479
      %v488 = vadd.f32 %v468, %v480
      %vm489 = vcmask 261120
      %490 = vst.msk [vmem:[%s232] sm:$0xff] %vm489, %v481
      %491 = vst.msk [vmem:[%s232 + $0x8] sm:$0xff] %vm489, %v482
      %492 = vst.msk [vmem:[%s232 + $0x10] sm:$0xff] %vm489, %v483
      %493 = vst.msk [vmem:[%s232 + $0x18] sm:$0xff] %vm489, %v484
      %494 = vst.msk [vmem:[%s232 + $0x20] sm:$0xff] %vm489, %v485
      %495 = vst.msk [vmem:[%s232 + $0x28] sm:$0xff] %vm489, %v486
      %496 = vst.msk [vmem:[%s232 + $0x30] sm:$0xff] %vm489, %v487
      %497 = vst.msk [vmem:[%s232 + $0x38] sm:$0xff] %vm489, %v488
      %p498 = scmp.lt.s32.totalorder %s18, 1
      %s499 = scalar_select %p498, %s18, 1
      %p500 = scmp.lt.s32.totalorder %s19, 0
      %s501 = scalar_select %p500, %s19, 0
      %s502 = smul.addr %s499, 8
      %s503 = sadd.s32 %s501, %s502
      %s504 = smul.addr %s503, 8
      %s505 = scalar_lea.vmem %s3, %s504
      // Predicated region
      $region33: #{dwconv_forward.1} parent=31 // pred_check
        %p506 = pneg %p126
      $region34: #{dwconv_forward.1} parent=31 // pred_check_branch
        %508 = sbr.rel (%p506) target = $region36
      $region35: #{dwconv_forward.1} parent=31 // pred_region
        _
      $region36: #{dwconv_forward.1} parent=31 // pred_fallthru
        _
    $region32: #{dwconv_forward.1} parent=5 // pred_fallthru
      _
    %p509 = scmp.le.s32.totalorder 2, %s9
    // Predicated region
    $region37: #{dwconv_forward.1} parent=5 // pred_check
      %p510 = pneg %p509
    $region38: #{dwconv_forward.1} parent=5 // pred_check_branch
      %512 = sbr.rel (%p510) target = $region40
    $region39: #{dwconv_forward.1} parent=5 // pred_region
      %s513 = ssub.s32 %s9, 2
      // Predicated region
      $region41: #{dwconv_forward.1} parent=39 // pred_check
        %p514 = pneg %p132
      $region42: #{dwconv_forward.1} parent=39 // pred_check_branch
        %516 = sbr.rel (%p514) target = $region44
      $region43: #{dwconv_forward.1} parent=39 // pred_region
        %p517 = scmp.lt.s32.totalorder %s20, 1
        %s518 = scalar_select %p517, %s20, 1
        %p519 = scmp.lt.s32.totalorder %s21, 0
        %s520 = scalar_select %p519, %s21, 0
        %s521 = smul.addr %s518, 8
        %s522 = sadd.s32 %s520, %s521
        %s523 = smul.addr %s522, 8
        %s524 = scalar_lea.vmem %s3, %s523
      $region44: #{dwconv_forward.1} parent=39 // pred_fallthru
        _
    $region40: #{dwconv_forward.1} parent=5 // pred_fallthru
      _
  $region6: #{dwconv_forward.1} parent=0 // loop_footer
    %s13 = sadd.s32 1, %s9
  $region7: #{dwconv_forward.1} parent=0 // loop_footer_branch
    %8 = sbr.rel target = $region3
  $region8: #{dwconv_forward.1} parent=0 // loop_exit
    _

</llo_original>
